<compile_context>
chip_gen: v7x
topology: tpu7x:2x2x1
jax: 0.10.0
libtpu: 0.0.40
codegen_flags: <defaults>
</compile_context>

<pallas_src>
import functools
import math

import jax
import jax.numpy as jnp
from jax.experimental import pallas as pl
from jax.experimental.pallas import tpu as pltpu

_LANE = 128
_SMALL_BYTES = 256 * 1024  # below this total input size, plain XLA fusion wins


def _piecewise_kernel(*refs, clearance, omega_plus, omega_minus):
    """refs = (x_ref_0, ..., x_ref_{L-1}, o_ref); every block is (tile_r, W)."""
    x_refs, o_ref = refs[:-1], refs[-1]

    c = jnp.float32(clearance)
    wp = jnp.float32(omega_plus)
    wm = jnp.float32(omega_minus)
    zero = jnp.float32(0.0)

    acc = None
    for x_ref in x_refs:
        s = x_ref[...].astype(jnp.float32) + c
        # Exact max/min form of the reference (kernel is mem-bound; VALU is free).
        pw = wp * jnp.maximum(zero, s) - wm * jnp.minimum(zero, s)
        acc = pw if acc is None else acc + pw

    o_ref[...] = acc.astype(o_ref.dtype)


def _piecewise_jnp(res_list, clearance, omega_plus, omega_minus, out_dtype):
    """Reference / small-tensor fast path (f32 math, identical to the kernel)."""
    acc = None
    for r in res_list:
        s = r.astype(jnp.float32) + jnp.float32(clearance)
        pw = (jnp.float32(omega_plus) * jnp.maximum(0.0, s)
              - jnp.float32(omega_minus) * jnp.minimum(0.0, s))
        acc = pw if acc is None else acc + pw
    return acc.astype(out_dtype)


def _vmem_limit_bytes():
    # Generation-aware scoped-VMEM limit with headroom under physical capacity:
    # v7x: 64 MiB/TC -> 48 MiB; v5e/v6e: 128 MiB -> 64 MiB (their 16/32 MiB
    # scoped defaults must be raised explicitly or big blocks fail to compile).
    try:
        info = pltpu.get_tpu_info()
        cap = int(getattr(info, "vmem_capacity_bytes", 64 * 1024 * 1024))
    except Exception:
        cap = 64 * 1024 * 1024
    return min((cap * 3) // 4, 64 * 1024 * 1024)


def piecewise_regularizer(residuals,
                          clearance: float = 0.05,
                          omega_plus: float = 1.0,
                          omega_minus: float = 0.0001,
                          use_pallas=None):
    """Pallas implementation of PieceWiseRegularizer.forward.

    `residuals` is a single jnp array or a list/tuple of same-shape arrays.
    Returns an array with the shape of the (first) residual; dtype follows
    PyTorch promotion (float inputs keep their dtype, int inputs -> float32).
    """
    if isinstance(residuals, (list, tuple)):
        res_list = list(residuals)
    else:
        res_list = [residuals]

    orig_shape = res_list[0].shape
    in_dtype = res_list[0].dtype
    for r in res_list[1:]:
        assert r.shape == orig_shape and r.dtype == in_dtype, \
            "list residuals must share shape and dtype"

    out_dtype = in_dtype if jnp.issubdtype(in_dtype, jnp.floating) else jnp.float32

    L = len(res_list)
    in_itemsize = jnp.dtype(in_dtype).itemsize
    out_itemsize = jnp.dtype(out_dtype).itemsize
    n = int(math.prod(orig_shape)) if len(orig_shape) else 1

    # ---- Small / degenerate tensors: fused XLA elementwise path, no kernel.
    total_bytes = L * n * in_itemsize
    if use_pallas is None:
        use_pallas = total_bytes >= _SMALL_BYTES
    if (not use_pallas) or n < 8 * _LANE:
        return _piecewise_jnp(res_list, clearance, omega_plus, omega_minus, out_dtype)

    # ---- Lane width: prefer the largest W (multiple of 128) that divides n,
    # so no padding / output slice copies are needed.
    W = None
    for cand in (4096, 2048, 1024, 512, 256, 128):
        if n >= 8 * cand and n % cand == 0:
            W = cand
            break
    if W is None:  # rare: n not a multiple of 128 -> pad only the flat tail
        for cand in (4096, 2048, 1024, 512, 256, 128):
            if n >= 8 * cand:
                W = cand
                break
    n_pad = pl.cdiv(n, W) * W
    rows = n_pad // W

    def to2d(r):
        flat = r.reshape(-1)
        if n_pad != n:
            flat = jnp.pad(flat, (0, n_pad - n))
        return flat.reshape(rows, W)

    inputs = [to2d(r) for r in res_list]

    # ---- VMEM-budgeted block size: (L inputs + 1 output) x double buffering,
    # with headroom for Mosaic internal scratch.
    vmem_limit = _vmem_limit_bytes()
    budget = (vmem_limit * 3) // 4
    per_block = min(budget // (2 * (L + 1)), 8 * 1024 * 1024)
    bytes_per_row = W * max(in_itemsize, out_itemsize)

    # Sublane packing multiple: 8 (f32/i32), 16 (bf16/f16), 32 (int8/fp8).
    sub = max(8, 32 // min(in_itemsize, out_itemsize))

    tile_r = min(max(per_block // bytes_per_row, sub), rows)
    if tile_r < rows:
        tile_r = max(sub, (tile_r // sub) * sub)

    # Keep >= 4 grid steps (pipeline depth; 2 per TensorCore on v7x) only when
    # the blocks stay >= 2 MiB, so single-TC chips never pay for a deep grid.
    min_steps = 4
    min_block_bytes = 2 * 1024 * 1024
    if pl.cdiv(rows, tile_r) < min_steps:
        cand = ((rows // min_steps) // sub) * sub
        if cand > 0 and cand * bytes_per_row >= min_block_bytes:
            tile_r = cand

    grid = (pl.cdiv(rows, tile_r),)  # last block may overhang; writes are masked

    kernel = functools.partial(
        _piecewise_kernel,
        clearance=float(clearance),
        omega_plus=float(omega_plus),
        omega_minus=float(omega_minus),
    )

    blk = pl.BlockSpec((tile_r, W), lambda i: (i, 0))

    out = pl.pallas_call(
        kernel,
        out_shape=jax.ShapeDtypeStruct((rows, W), out_dtype),
        grid=grid,
        in_specs=[blk] * L,
        out_specs=blk,
        compiler_params=pltpu.CompilerParams(
            dimension_semantics=("parallel",),
            vmem_limit_bytes=int(vmem_limit),
        ),
    )(*inputs)

    out_flat = out.reshape(-1)
    if n_pad != n:
        out_flat = out_flat[:n]
    return out_flat.reshape(orig_shape)


def _ref_piecewise(residuals, clearance=0.05, omega_plus=1.0, omega_minus=0.0001):
    def pw(x):
        s = x.astype(jnp.float32) + clearance
        return omega_plus * jnp.maximum(0.0, s) - omega_minus * jnp.minimum(0.0, s)
    if isinstance(residuals, (list, tuple)):
        return sum(pw(r) for r in residuals)
    return pw(residuals)


if __name__ == "__main__":
    key = jax.random.PRNGKey(0)
    k1, k2, k3, k4 = jax.random.split(key, 4)

    # Single-tensor case: NCHW residual (batch=2, channels=4, spatial=16x16).
    x = jax.random.normal(k1, (2, 4, 16, 16), dtype=jnp.float32)
    out_single = jax.block_until_ready(piecewise_regularizer(x, use_pallas=True))
    ref_single = _ref_piecewise(x)
    assert out_single.shape == x.shape and out_single.dtype == x.dtype
    assert jnp.allclose(out_single, ref_single, atol=1e-6, rtol=1e-6)

    # List case: sum of piecewise losses over two residual tensors.
    res_list = [
        jax.random.normal(k2, (2, 4, 16, 16), dtype=jnp.float32),
        jax.random.normal(k3, (2, 4, 16, 16), dtype=jnp.float32),
    ]
    out_list = jax.block_until_ready(piecewise_regularizer(res_list, use_pallas=True))
    ref_list = _ref_piecewise(res_list)
    assert out_list.shape == x.shape and out_list.dtype == x.dtype
    assert jnp.allclose(out_list, ref_list, atol=1e-6, rtol=1e-6)

    # bf16 residual: kernel computes in f32, output stays bf16.
    xb = jax.random.normal(k4, (2, 4, 16, 16), dtype=jnp.bfloat16)
    out_bf16 = jax.block_until_ready(piecewise_regularizer(xb, use_pallas=True))
    ref_bf16 = _ref_piecewise(xb).astype(jnp.bfloat16)
    assert out_bf16.shape == xb.shape and out_bf16.dtype == jnp.bfloat16
    assert jnp.allclose(out_bf16.astype(jnp.float32),
                        ref_bf16.astype(jnp.float32), atol=2e-2, rtol=2e-2)

    # Auto path on a tiny tensor falls back to fused XLA math (same result).
    out_auto = jax.block_until_ready(piecewise_regularizer(x))
    assert jnp.allclose(out_auto, ref_single, atol=1e-6, rtol=1e-6)

    print("KERNEL_OK")
</pallas_src>

<mosaic_0001>
module attributes {stable_mosaic.version = 11 : i64} {
  func.func @_piecewise_kernel(%arg0: i32, %arg1: memref<8x256xf32, #tpu.memory_space<vmem>>, %arg2: memref<8x256xf32, #tpu.memory_space<vmem>>) attributes {dimension_semantics = [#tpu.dimension_semantics<parallel>], iteration_bounds = array<i64: 1>, scalar_prefetch = 0 : i64, scratch_operands = 0 : i64, tpu.core_type = #tpu.core_type<tc>, window_params = [{transform_indices = @transform_0, window_bounds = array<i64: 8, 256>}, {transform_indices = @transform_1, window_bounds = array<i64: 8, 256>}]} {
    %c0 = arith.constant 0 : index
    %c0_0 = arith.constant 0 : index
    %0 = vector.load %arg1[%c0, %c0_0] : memref<8x256xf32, #tpu.memory_space<vmem>>, vector<8x256xf32>
    %cst = arith.constant 5.000000e-02 : f32
    %1 = vector.broadcast %cst : f32 to vector<8x256xf32>
    %2 = arith.addf %0, %1 : vector<8x256xf32>
    %cst_1 = arith.constant 0.000000e+00 : f32
    %3 = vector.broadcast %cst_1 : f32 to vector<8x256xf32>
    %4 = arith.maximumf %3, %2 : vector<8x256xf32>
    %cst_2 = arith.constant 1.000000e+00 : f32
    %5 = vector.broadcast %cst_2 : f32 to vector<8x256xf32>
    %6 = arith.mulf %5, %4 : vector<8x256xf32>
    %cst_3 = arith.constant 0.000000e+00 : f32
    %7 = vector.broadcast %cst_3 : f32 to vector<8x256xf32>
    %8 = arith.minimumf %7, %2 : vector<8x256xf32>
    %cst_4 = arith.constant 9.99999974E-5 : f32
    %9 = vector.broadcast %cst_4 : f32 to vector<8x256xf32>
    %10 = arith.mulf %9, %8 : vector<8x256xf32>
    %11 = arith.subf %6, %10 : vector<8x256xf32>
    %c0_5 = arith.constant 0 : index
    %c0_6 = arith.constant 0 : index
    %12 = vector.load %arg2[%c0_5, %c0_6] : memref<8x256xf32, #tpu.memory_space<vmem>>, vector<8x256xf32>
    tpu.vector_store %arg2[%c0_5, %c0_6], %11 {strides = array<i32>} : memref<8x256xf32, #tpu.memory_space<vmem>>, vector<8x256xf32>,
    return
  }
  func.func @transform_0(%arg0: i32) -> (i32, i32) {
    %c0_i32 = arith.constant 0 : i32
    %c0_i32_0 = arith.constant 0 : i32
    return %arg0, %c0_i32 : i32, i32
  }
  func.func @transform_1(%arg0: i32) -> (i32, i32) {
    %c0_i32 = arith.constant 0 : i32
    %c0_i32_0 = arith.constant 0 : i32
    return %arg0, %c0_i32 : i32, i32
  }
}

</mosaic_0001>

<llo_original>
// kernel: tpu_custom_call.1
$region0: #{tpu_custom_call.1}
  #allocation0 [shape = 'u32[]', space=smem, size = 0x4, offset = 0x4, fixed_abs, tag = 'smem constant byte address 0x4 - core index']
  #allocation1 [shape = 'u32[144,128]{1,0:T(1,128)}', space=vmem, size = 0x12000, scoped, tag = 'internal scratch']
  %s0 = inlined_call_operand.hbm [shape: f32[8,256], index: 0, kind: input, shape index: {}]
  %s1 = inlined_call_operand.hbm [shape: f32[8,256], index: 1, kind: output, shape index: {}]
  %s2 = sld [smem:[#allocation0]]
  $region18: #{tpu_custom_call.1} parent=0
    _
  %s4 = ssub.s32 1, %s2
  %s5 = scalar_select 0, %s4, %s2
  $region1: #{tpu_custom_call.1} parent=0
    #allocation2 [shape = 'u8[8192]{0}', space=vmem, size = 0x2000, scoped, tag = 'input window, operand 0, single buffered']
    #allocation3 [shape = 's32[1]{0}', space=sflag, size = 0x4, scoped, tag = 'scoped memory for tpu_custom_call.1']
    #allocation4 [shape = 's32[1]{0}', space=sflag, size = 0x4, scoped, tag = 'scoped memory for tpu_custom_call.1']
    #allocation5 [shape = 'u8[8192]{0}', space=vmem, size = 0x2000, scoped, tag = 'output window, operand 0, single buffered']
    %6 = vsyncpa [#allocation3], 0
    %7 = vsyncpa [#allocation4], 0
    // Predicated region
    $region2: #{tpu_custom_call.1} parent=1 // pred_check
      _
    $region3: #{tpu_custom_call.1} parent=1 // pred_check_branch
      %9 = sbr.rel (0) target = $region5
    $region4: #{tpu_custom_call.1} parent=1 // pred_region
      %s11 = ssub.s32 256, 256
      %12 = vsyncadd [#allocation3], %s11
      %s14 = sshll.u32 [#allocation2], 4
      %s15 = int_to_ptr.vmem [resolvable:$true] %s14
      %17 = dma.hbm_to_vmem [thread:$0]  %s0, 256, %s15, [#allocation3]
    $region5: #{tpu_custom_call.1} parent=1 // pred_fallthru
      _
    // Predicated region
    $region6: #{tpu_custom_call.1} parent=1 // pred_check
      _
    $region7: #{tpu_custom_call.1} parent=1 // pred_check_branch
      %19 = sbr.rel (0) target = $region9
    $region8: #{tpu_custom_call.1} parent=1 // pred_region
      %20 = dma.done [#allocation3], 256
    $region9: #{tpu_custom_call.1} parent=1 // pred_fallthru
      _
    %v21 = vld [vmem:[#allocation2] sm:$0xff]
    %v22 = vld [vmem:[#allocation2 + $0x8] sm:$0xff]
    %v23 = vadd.f32 %v21, 0.05
    %v24 = vadd.f32 %v22, 0.05
    %v25 = vmax.f32 %v23, 0.0
    %v26 = vmax.f32 %v24, 0.0
    %v27 = vmin.f32 %v23, 0.0
    %v28 = vmin.f32 %v24, 0.0
    %v29 = vmul.f32 %v27, 0.0001
    %v30 = vmul.f32 %v28, 0.0001
    %v31 = vsub.f32 %v25, %v29
    %v32 = vsub.f32 %v26, %v30
    %33 = vst [vmem:[#allocation5] sm:$0xff] %v31
    %34 = vst [vmem:[#allocation5 + $0x8] sm:$0xff] %v32
    // Predicated region
    $region10: #{tpu_custom_call.1} parent=1 // pred_check
      _
    $region11: #{tpu_custom_call.1} parent=1 // pred_check_branch
      %36 = sbr.rel (0) target = $region13
    $region12: #{tpu_custom_call.1} parent=1 // pred_region
      %s38 = ssub.s32 256, 256
      %39 = vsyncadd [#allocation4], %s38
      %s41 = sshll.u32 [#allocation5], 4
      %s42 = int_to_ptr.vmem [resolvable:$true] %s41
      %44 = dma.vmem_to_hbm [thread:$0]  %s42, 256, %s1, [#allocation4]
    $region13: #{tpu_custom_call.1} parent=1 // pred_fallthru
      _
    // Predicated region
    $region14: #{tpu_custom_call.1} parent=1 // pred_check
      _
    $region15: #{tpu_custom_call.1} parent=1 // pred_check_branch
      %46 = sbr.rel (0) target = $region17
    $region16: #{tpu_custom_call.1} parent=1 // pred_region
      %47 = dma.done [#allocation4], 256
    $region17: #{tpu_custom_call.1} parent=1 // pred_fallthru
      _
    %48 = vsyncpa [#allocation3], 1
    %49 = vsyncpa [#allocation4], 1

</llo_original>
